<compile_context>
chip_gen: v6e
topology: v6e:2x2x1
jax: 0.10.0
libtpu: 0.0.40
codegen_flags: <defaults>
</compile_context>

<pallas_src>
import functools

import numpy as np
import jax
import jax.numpy as jnp
from jax.experimental import pallas as pl
from jax.experimental.pallas import tpu as pltpu


# ---------------------------------------------------------------------------
# Deterministic parameter construction (Pascal / binomial blur kernel).
# ---------------------------------------------------------------------------
def get_pascal_kernel_1d(kernel_size: int) -> np.ndarray:
    row = np.array([1.0])
    for _ in range(kernel_size - 1):
        row = np.convolve(row, [1.0, 1.0])
    return row


def get_pascal_kernel_2d(kernel_size: int, norm: bool = True) -> np.ndarray:
    a = get_pascal_kernel_1d(kernel_size)
    k = np.outer(a, a)
    if norm:
        k = k / k.sum()
    return k.astype(np.float32)


# ---------------------------------------------------------------------------
# Pallas kernel: per-W-phase stride-1 max pool fused into the W blur pass,
# then an H blur pass with the conv stride folded in.  Everything is
# elementwise VPU work over (cols, B*C) lane-dense tiles.
#
#   x_ref : (s, H, W2, nblk)   W-phase-major, channel-last input block
#   o_ref : (Ho, Wo, nblk)     channel-last output block
#
# phase_plan is a static tuple of per-phase entries
#   (r, a, b, pad_l, pad_r, ((coef, col_off), ...))
# where [a, b) is the valid phase-column window of the max pool, pad_l/pad_r
# implement the conv zero padding along W, and col_off selects each tap's
# Wo-wide slice of the padded max-pool plane.
# ---------------------------------------------------------------------------
def _max_blur_pool_kernel(x_ref, o_ref, *, s, m, K, p, taps, Ho, Wo,
                          HrowsP, rows_used, phase_plan, acc_dtype):
    nblk = o_ref.shape[-1]
    acc = jnp.dtype(acc_dtype)

    if rows_used <= 0 or not phase_plan:
        o_ref[...] = jnp.zeros(o_ref.shape, o_ref.dtype)
        return

    rows_in = rows_used + m - 1            # input rows needed by the max pool

    # ---- fused: stride-1 max pool (per W phase) + blur along W --------------
    tw = None                              # (rows_used, Wo, nblk)
    for (r, a, b, pad_l, pad_r, tap_list) in phase_plan:
        # separable max pool for this phase: max over dj (columns), then di (rows)
        row_max = None
        for dj in range(m):
            ph = (r + dj) % s
            q = (r + dj) // s
            piece = x_ref[ph, 0:rows_in, q + a:q + b, :]
            row_max = piece if row_max is None else jnp.maximum(row_max, piece)
        mx = None
        for di in range(m):
            sl = row_max[di:di + rows_used]
            mx = sl if mx is None else jnp.maximum(mx, sl)
        mx = mx.astype(acc)
        # small zero-column pads implement the conv zero padding along W
        if pad_l or pad_r:
            mx = jnp.pad(mx, ((0, 0), (pad_l, pad_r), (0, 0)))
        # blur taps of this phase (stride folded into the phase decomposition)
        for coef, off in tap_list:
            contrib = coef * mx[:, off:off + Wo, :]
            tw = contrib if tw is None else tw + contrib

    # ---- blur along H (stride folded via a free leading-dim reshape) --------
    pad_top = p
    pad_bot = HrowsP - p - rows_used
    t = jnp.pad(tw, ((pad_top, pad_bot), (0, 0), (0, 0)))   # zero rows = conv pad
    t4 = t.reshape(HrowsP // s, s, Wo, nblk)
    out = None
    for dp in range(K):
        contrib = taps[dp] * t4[dp // s:dp // s + Ho, dp % s]
        out = contrib if out is None else out + contrib
    o_ref[...] = out.astype(o_ref.dtype)


# ---------------------------------------------------------------------------
# Static planning helpers.
# ---------------------------------------------------------------------------
def _plan_phases(K, s, m, p, W, Wo, taps):
    """Static per-W-phase plan for the fused max-pool + W-blur pass."""
    plan = []
    for r in range(s):
        tap_list = [(float(taps[dq]), (dq - p) // s)
                    for dq in range(K) if (dq - p) % s == r]
        if not tap_list:
            continue
        # number of valid stride-1 max-pool columns whose W index == r (mod s)
        ncols = (W - m - r) // s + 1 if (W - m) >= r else 0
        if ncols <= 0:
            continue
        us = [u for _, u in tap_list]
        u_lo, u_hi = min(us), max(us)
        a = max(0, u_lo)
        b = min(ncols, Wo + u_hi)
        if b <= a:
            continue                       # all accesses fall in the zero pad
        pad_l = a - u_lo
        pad_r = (Wo + u_hi) - b
        tap_offs = tuple((coef, u - u_lo) for coef, u in tap_list)
        plan.append((r, a, b, pad_l, pad_r, tap_offs))
    return tuple(plan)


def _tpu_vmem_capacity_bytes():
    try:
        return int(pltpu.get_tpu_info().vmem_capacity_bytes)
    except Exception:
        return 64 * 2**20                  # conservative (v7x per-TC VMEM)


def _supports_bf16_vpu():
    # bf16 VALU exists on v6e / v7x; v5e and older do not.
    try:
        kind = jax.devices()[0].device_kind.lower()
    except Exception:
        return False
    return ("v6" in kind) or ("v7" in kind) or ("tpu7" in kind)


def _pick_channel_block(n, io_per_lane_db, interm_per_lane, budget):
    """Largest lane-friendly divisor of n whose real VMEM footprint fits."""
    per_lane = io_per_lane_db + interm_per_lane
    if n % 128 == 0:
        nblk = 128
        while n % (nblk * 2) == 0 and (nblk * 2) * per_lane <= budget:
            nblk *= 2
        # keep >=2 grid steps so dimension_semantics=("parallel",) can shard
        # across v7x's two TensorCores (no effect on v5e/v6e).
        while n // nblk < 2 and nblk > 128:
            nblk //= 2
        return nblk
    # TODO(synk): for a fused channel axis that is neither lane-aligned nor
    # cheap to pad, and for H*W too large for a single-axis grid, add a second
    # grid axis tiling H with a (m-1)+(K-1) row halo (manual DMA).
    return n


# ---------------------------------------------------------------------------
# Public wrapper.
# ---------------------------------------------------------------------------
def max_blur_pool2d(x, kernel_size=3, stride=2, max_pool_size=2,
                    ceil_mode=False, channels_last_out=False):
    # ceil_mode only changes the output size of a *strided* max pool; here the
    # max pool has stride 1, so it is shape-neutral and accepted unused.
    del ceil_mode
    B, C, H, W = x.shape
    s, m, K = int(stride), int(max_pool_size), int(kernel_size)
    p = (K - 1) // 2

    Hp, Wp = H - m + 1, W - m + 1
    if Hp <= 0 or Wp <= 0:
        raise ValueError("input spatial dims smaller than max_pool_size")
    Ho = (Hp + 2 * p - K) // s + 1
    Wo = (Wp + 2 * p - K) // s + 1
    if Ho <= 0 or Wo <= 0:
        raise ValueError("output spatial dims would be empty")
    N = B * C

    # Normalized separable Pascal taps baked as Python constants
    # (outer(taps, taps) == get_pascal_kernel_2d(K, norm=True)).
    a1d = get_pascal_kernel_1d(K)
    taps = tuple(float(v) / float(a1d.sum()) for v in a1d)

    # --- static polyphase plan ------------------------------------------------
    phase_plan = _plan_phases(K, s, m, p, W, Wo, taps)
    HrowsP = s * (Ho - 1 + -(-K // s))           # padded blur-intermediate rows
    rows_used = max(0, min(Hp, HrowsP - p))      # max-pool rows actually needed

    # --- lane padding of the fused channel axis (only when cheap) -------------
    Npad = N
    if N % 128:
        cand = -(-N // 128) * 128
        if (cand - N) * 4 <= N:                  # <= 25% extra HBM traffic
            Npad = cand

    # --- channel-last, W-phase-major layout: (s, H, W/s, Npad) ----------------
    W_padded = -(-W // s) * s
    xw = x
    if W_padded != W:                            # pad cols are never read
        xw = jnp.pad(xw, ((0, 0), (0, 0), (0, 0), (0, W_padded - W)))
    W2 = W_padded // s
    xp = jnp.transpose(xw.reshape(B, C, H, W2, s),
                       (4, 2, 3, 0, 1)).reshape(s, H, W2, N)
    if Npad != N:
        xp = jnp.pad(xp, ((0, 0), (0, 0), (0, 0), (0, Npad - N)))

    # --- accumulation dtype (bf16 intermediates only where the VPU has bf16) --
    acc_dtype = jnp.float32
    if x.dtype == jnp.bfloat16 and _supports_bf16_vpu():
        acc_dtype = jnp.bfloat16
    acc_bytes = jnp.dtype(acc_dtype).itemsize

    # --- generation-aware VMEM budgeting & channel-block selection ------------
    itemsize = jnp.dtype(x.dtype).itemsize
    in_per_lane = s * H * W2 * itemsize
    out_per_lane = Ho * Wo * itemsize
    max_mx_cols = max([(b - a) + padl + padr
                       for (_, a, b, padl, padr, _) in phase_plan] + [1])
    interm_per_lane = int(1.5 * acc_bytes * (
        rows_used * Wo + HrowsP * Wo + (rows_used + m) * max_mx_cols + Ho * Wo))

    cap = _tpu_vmem_capacity_bytes()
    budget = max(8 << 20, cap - max(16 << 20, cap // 4))      # leave headroom
    nblk = _pick_channel_block(Npad, 2 * (in_per_lane + out_per_lane),
                               interm_per_lane, budget)
    grid = (Npad // nblk,)
    footprint = nblk * (2 * (in_per_lane + out_per_lane) + interm_per_lane)
    vmem_limit = int(min(cap - (8 << 20),
                         max(32 << 20, footprint + (footprint >> 1) + (4 << 20))))
    vmem_limit = max(vmem_limit, 16 << 20)

    kern = functools.partial(
        _max_blur_pool_kernel, s=s, m=m, K=K, p=p, taps=taps, Ho=Ho, Wo=Wo,
        HrowsP=HrowsP, rows_used=rows_used, phase_plan=phase_plan,
        acc_dtype=acc_dtype)

    out_cl = pl.pallas_call(
        kern,
        out_shape=jax.ShapeDtypeStruct((Ho, Wo, Npad), x.dtype),
        grid=grid,
        in_specs=[pl.BlockSpec((s, H, W2, nblk), lambda nb: (0, 0, 0, nb))],
        out_specs=pl.BlockSpec((Ho, Wo, nblk), lambda nb: (0, 0, nb)),
        compiler_params=pltpu.CompilerParams(
            dimension_semantics=("parallel",),
            allow_input_fusion=[True],
            vmem_limit_bytes=vmem_limit),
    )(xp)

    out_cl = out_cl[:, :, :N]
    if channels_last_out:
        return out_cl.reshape(Ho, Wo, B, C)
    return jnp.transpose(out_cl.reshape(Ho, Wo, B, C), (2, 3, 0, 1))


# ---------------------------------------------------------------------------
# Pure-JAX reference (correctness check only).
# ---------------------------------------------------------------------------
def _reference_max_blur_pool(x, kernel_size=3, stride=2, max_pool_size=2):
    B, C, H, W = x.shape
    mp = jax.lax.reduce_window(
        x, -jnp.inf, jax.lax.max,
        (1, 1, max_pool_size, max_pool_size), (1, 1, 1, 1), 'VALID')
    k2d = jnp.asarray(get_pascal_kernel_2d(kernel_size, norm=True), x.dtype)
    kern = jnp.broadcast_to(k2d, (C, 1, kernel_size, kernel_size))
    pad = (kernel_size - 1) // 2
    return jax.lax.conv_general_dilated(
        mp, kern, (stride, stride), ((pad, pad), (pad, pad)),
        feature_group_count=C,
        dimension_numbers=('NCHW', 'OIHW', 'NCHW'))


if __name__ == "__main__":
    key = jax.random.PRNGKey(0)

    # Main config (module defaults): kernel_size=3, stride=2, max_pool_size=2.
    x = jax.random.normal(key, (2, 4, 16, 16), dtype=jnp.float32)
    out = max_blur_pool2d(x, kernel_size=3, stride=2, max_pool_size=2,
                          ceil_mode=False)
    out = jax.block_until_ready(out)
    ref = jax.block_until_ready(
        _reference_max_blur_pool(x, kernel_size=3, stride=2, max_pool_size=2))
    assert out.shape == (2, 4, 8, 8), out.shape
    np.testing.assert_allclose(np.asarray(out), np.asarray(ref),
                               rtol=1e-5, atol=1e-5)

    # kornia doctest anchor: eye(5) -> [[0.5625, 0.3125], [0.3125, 0.8750]].
    xe = jnp.eye(5, dtype=jnp.float32)[None, None]
    oe = jax.block_until_ready(max_blur_pool2d(xe, 3, 2, 2, False))
    np.testing.assert_allclose(
        np.asarray(oe),
        np.array([[[[0.5625, 0.3125], [0.3125, 0.8750]]]], dtype=np.float32),
        rtol=1e-6, atol=1e-6)

    # Edge cases for the polyphase folding: s=3/m=3 with H!=W and W % s != 0,
    # and an even blur kernel size.
    extra = [
        ((1, 3, 9, 11), dict(kernel_size=3, stride=3, max_pool_size=3)),
        ((2, 3, 10, 13), dict(kernel_size=4, stride=2, max_pool_size=2)),
    ]
    for i, (shp, kw) in enumerate(extra):
        xi = jax.random.normal(jax.random.fold_in(key, i + 1), shp,
                               dtype=jnp.float32)
        oi = jax.block_until_ready(max_blur_pool2d(xi, **kw))
        ri = jax.block_until_ready(_reference_max_blur_pool(
            xi, kw["kernel_size"], kw["stride"], kw["max_pool_size"]))
        np.testing.assert_allclose(np.asarray(oi), np.asarray(ri),
                                   rtol=1e-5, atol=1e-5)

    print("KERNEL_OK")
</pallas_src>

<mosaic_0001>
module attributes {stable_mosaic.version = 11 : i64} {
  func.func @_max_blur_pool_kernel(%arg0: i32, %arg1: memref<2x16x8x8xf32, #tpu.memory_space<vmem>>, %arg2: memref<8x8x8xf32, #tpu.memory_space<vmem>>) attributes {dimension_semantics = [#tpu.dimension_semantics<parallel>], iteration_bounds = array<i64: 1>, scalar_prefetch = 0 : i64, scratch_operands = 0 : i64, tpu.core_type = #tpu.core_type<tc>, window_params = [{transform_indices = @transform_0, window_bounds = array<i64: 2, 16, 8, 8>}, {transform_indices = @transform_1, window_bounds = array<i64: 8, 8, 8>}]} {
    %c0 = arith.constant 0 : index
    %c0_0 = arith.constant 0 : index
    %c0_1 = arith.constant 0 : index
    %c0_2 = arith.constant 0 : index
    %0 = vector.load %arg1[%c0, %c0_0, %c0_1, %c0_2] : memref<2x16x8x8xf32, #tpu.memory_space<vmem>>, vector<1x16x8x8xf32>
    %1 = vector.shape_cast %0 : vector<1x16x8x8xf32> to vector<16x8x8xf32>
    %c1 = arith.constant 1 : index
    %c0_3 = arith.constant 0 : index
    %c0_4 = arith.constant 0 : index
    %c0_5 = arith.constant 0 : index
    %2 = vector.load %arg1[%c1, %c0_3, %c0_4, %c0_5] : memref<2x16x8x8xf32, #tpu.memory_space<vmem>>, vector<1x16x8x8xf32>
    %3 = vector.shape_cast %2 : vector<1x16x8x8xf32> to vector<16x8x8xf32>
    %4 = arith.maximumf %1, %3 : vector<16x8x8xf32>
    %5 = vector.extract_strided_slice %4 {offsets = [0, 0, 0], sizes = [15, 8, 8], strides = [1, 1, 1]} : vector<16x8x8xf32> to vector<15x8x8xf32>
    %6 = vector.extract_strided_slice %4 {offsets = [1, 0, 0], sizes = [15, 8, 8], strides = [1, 1, 1]} : vector<16x8x8xf32> to vector<15x8x8xf32>
    %7 = arith.maximumf %5, %6 : vector<15x8x8xf32>
    %cst = arith.constant 5.000000e-01 : f32
    %8 = vector.broadcast %cst : f32 to vector<15x8x8xf32>
    %9 = arith.mulf %8, %7 : vector<15x8x8xf32>
    %c1_6 = arith.constant 1 : index
    %c0_7 = arith.constant 0 : index
    %c0_8 = arith.constant 0 : index
    %c0_9 = arith.constant 0 : index
    %10 = vector.load %arg1[%c1_6, %c0_7, %c0_8, %c0_9] : memref<2x16x8x8xf32, #tpu.memory_space<vmem>>, vector<1x16x7x8xf32>
    %11 = vector.shape_cast %10 : vector<1x16x7x8xf32> to vector<16x7x8xf32>
    %c0_10 = arith.constant 0 : index
    %c0_11 = arith.constant 0 : index
    %c1_12 = arith.constant 1 : index
    %c0_13 = arith.constant 0 : index
    %12 = vector.load %arg1[%c0_10, %c0_11, %c1_12, %c0_13] : memref<2x16x8x8xf32, #tpu.memory_space<vmem>>, vector<1x16x7x8xf32>
    %13 = vector.shape_cast %12 : vector<1x16x7x8xf32> to vector<16x7x8xf32>
    %14 = arith.maximumf %11, %13 : vector<16x7x8xf32>
    %15 = vector.extract_strided_slice %14 {offsets = [0, 0, 0], sizes = [15, 7, 8], strides = [1, 1, 1]} : vector<16x7x8xf32> to vector<15x7x8xf32>
    %16 = vector.extract_strided_slice %14 {offsets = [1, 0, 0], sizes = [15, 7, 8], strides = [1, 1, 1]} : vector<16x7x8xf32> to vector<15x7x8xf32>
    %17 = arith.maximumf %15, %16 : vector<15x7x8xf32>
    %c0_i32 = arith.constant 0 : i32
    %18 = arith.sitofp %c0_i32 : i32 to f32
    %19 = vector.broadcast %18 : f32 to vector<15x1x8xf32>
    %20 = tpu.concatenate %19, %17 in 1 : vector<15x1x8xf32>, vector<15x7x8xf32> -> vector<15x8x8xf32>
    %21 = vector.broadcast %18 : f32 to vector<15x1x8xf32>
    %22 = tpu.concatenate %20, %21 in 1 : vector<15x8x8xf32>, vector<15x1x8xf32> -> vector<15x9x8xf32>
    %23 = vector.extract_strided_slice %22 {offsets = [0, 0, 0], sizes = [15, 8, 8], strides = [1, 1, 1]} : vector<15x9x8xf32> to vector<15x8x8xf32>
    %cst_14 = arith.constant 2.500000e-01 : f32
    %24 = vector.broadcast %cst_14 : f32 to vector<15x8x8xf32>
    %25 = arith.mulf %24, %23 : vector<15x8x8xf32>
    %26 = arith.addf %9, %25 : vector<15x8x8xf32>
    %27 = vector.extract_strided_slice %22 {offsets = [0, 1, 0], sizes = [15, 8, 8], strides = [1, 1, 1]} : vector<15x9x8xf32> to vector<15x8x8xf32>
    %cst_15 = arith.constant 2.500000e-01 : f32
    %28 = vector.broadcast %cst_15 : f32 to vector<15x8x8xf32>
    %29 = arith.mulf %28, %27 : vector<15x8x8xf32>
    %30 = arith.addf %26, %29 : vector<15x8x8xf32>
    %c0_i32_16 = arith.constant 0 : i32
    %31 = arith.sitofp %c0_i32_16 : i32 to f32
    %32 = vector.broadcast %31 : f32 to vector<1x8x8xf32>
    %33 = tpu.concatenate %32, %30 in 0 : vector<1x8x8xf32>, vector<15x8x8xf32> -> vector<16x8x8xf32>
    %34 = vector.broadcast %31 : f32 to vector<2x8x8xf32>
    %35 = tpu.concatenate %33, %34 in 0 : vector<16x8x8xf32>, vector<2x8x8xf32> -> vector<18x8x8xf32>
    %36 = vector.shape_cast %35 : vector<18x8x8xf32> to vector<9x2x8x8xf32>
    %37 = vector.extract_strided_slice %36 {offsets = [0, 0, 0, 0], sizes = [8, 1, 8, 8], strides = [1, 1, 1, 1]} : vector<9x2x8x8xf32> to vector<8x1x8x8xf32>
    %38 = vector.shape_cast %37 : vector<8x1x8x8xf32> to vector<8x8x8xf32>
    %cst_17 = arith.constant 2.500000e-01 : f32
    %39 = vector.broadcast %cst_17 : f32 to vector<8x8x8xf32>
    %40 = arith.mulf %39, %38 : vector<8x8x8xf32>
    %41 = vector.extract_strided_slice %36 {offsets = [0, 1, 0, 0], sizes = [8, 1, 8, 8], strides = [1, 1, 1, 1]} : vector<9x2x8x8xf32> to vector<8x1x8x8xf32>
    %42 = vector.shape_cast %41 : vector<8x1x8x8xf32> to vector<8x8x8xf32>
    %cst_18 = arith.constant 5.000000e-01 : f32
    %43 = vector.broadcast %cst_18 : f32 to vector<8x8x8xf32>
    %44 = arith.mulf %43, %42 : vector<8x8x8xf32>
    %45 = arith.addf %40, %44 : vector<8x8x8xf32>
    %46 = vector.extract_strided_slice %36 {offsets = [1, 0, 0, 0], sizes = [8, 1, 8, 8], strides = [1, 1, 1, 1]} : vector<9x2x8x8xf32> to vector<8x1x8x8xf32>
    %47 = vector.shape_cast %46 : vector<8x1x8x8xf32> to vector<8x8x8xf32>
    %cst_19 = arith.constant 2.500000e-01 : f32
    %48 = vector.broadcast %cst_19 : f32 to vector<8x8x8xf32>
    %49 = arith.mulf %48, %47 : vector<8x8x8xf32>
    %50 = arith.addf %45, %49 : vector<8x8x8xf32>
    %c0_20 = arith.constant 0 : index
    %c0_21 = arith.constant 0 : index
    %c0_22 = arith.constant 0 : index
    %51 = vector.load %arg2[%c0_20, %c0_21, %c0_22] : memref<8x8x8xf32, #tpu.memory_space<vmem>>, vector<8x8x8xf32>
    tpu.vector_store %arg2[%c0_20, %c0_21, %c0_22], %50 {strides = array<i32>} : memref<8x8x8xf32, #tpu.memory_space<vmem>>, vector<8x8x8xf32>,
    return
  }
  func.func @transform_0(%arg0: i32) -> (i32, i32, i32, i32) {
    %c0_i32 = arith.constant 0 : i32
    %c0_i32_0 = arith.constant 0 : i32
    %c0_i32_1 = arith.constant 0 : i32
    %c0_i32_2 = arith.constant 0 : i32
    return %c0_i32, %c0_i32_0, %c0_i32_1, %arg0 : i32, i32, i32, i32
  }
  func.func @transform_1(%arg0: i32) -> (i32, i32, i32) {
    %c0_i32 = arith.constant 0 : i32
    %c0_i32_0 = arith.constant 0 : i32
    %c0_i32_1 = arith.constant 0 : i32
    return %c0_i32, %c0_i32_0, %arg0 : i32, i32, i32
  }
}

</mosaic_0001>

<llo_original>
// kernel: tpu_custom_call.1
$region0: #{tpu_custom_call.1}
  #allocation0 [shape = 'u32[]', space=smem, size = 0x4, offset = 0x4, fixed_abs, tag = 'smem constant byte address 0x4 - core index']
  #allocation1 [shape = 'u32[144,128]{1,0:T(1,128)}', space=vmem, size = 0x12000, scoped, tag = 'internal scratch']
  %s0 = inlined_call_operand.vmem [shape: f32[2,16,8,8], index: 0, kind: input, shape index: {}]
  %s1 = inlined_call_operand.hbm [shape: f32[8,8,8], index: 1, kind: output, shape index: {}]
  %s2 = sld [smem:[#allocation0]]
  $region14: #{tpu_custom_call.1} parent=0
    _
  %s4 = ssub.s32 1, %s2
  %s5 = scalar_select 0, %s4, %s2
  $region1: #{tpu_custom_call.1} parent=0
    #allocation2 [shape = 'u8[32768]{0}', space=vmem, size = 0x8000, scoped, tag = 'output window, operand 0, single buffered']
    #allocation3 [shape = 's32[1]{0}', space=sflag, size = 0x4, scoped, tag = 'scoped memory for tpu_custom_call.1']
    %6 = vsyncpa [#allocation3], 0
    // Predicated region
    $region2: #{tpu_custom_call.1} parent=1 // pred_check
      _
    $region3: #{tpu_custom_call.1} parent=1 // pred_check_branch
      %8 = sbr.rel (0) target = $region5
    $region4: #{tpu_custom_call.1} parent=1 // pred_region
      _
    $region5: #{tpu_custom_call.1} parent=1 // pred_fallthru
      _
    %v9 = vld [vmem:[%s0] sm:$0xff]
    %v10 = vld [vmem:[%s0 + $0x8] sm:$0xff]
    %v11 = vld [vmem:[%s0 + $0x10] sm:$0xff]
    %v12 = vld [vmem:[%s0 + $0x18] sm:$0xff]
    %v13 = vld [vmem:[%s0 + $0x20] sm:$0xff]
    %v14 = vld [vmem:[%s0 + $0x28] sm:$0xff]
    %v15 = vld [vmem:[%s0 + $0x30] sm:$0xff]
    %v16 = vld [vmem:[%s0 + $0x38] sm:$0xff]
    %v17 = vld [vmem:[%s0 + $0x40] sm:$0xff]
    %v18 = vld [vmem:[%s0 + $0x48] sm:$0xff]
    %v19 = vld [vmem:[%s0 + $0x50] sm:$0xff]
    %v20 = vld [vmem:[%s0 + $0x58] sm:$0xff]
    %v21 = vld [vmem:[%s0 + $0x60] sm:$0xff]
    %v22 = vld [vmem:[%s0 + $0x68] sm:$0xff]
    %v23 = vld [vmem:[%s0 + $0x70] sm:$0xff]
    %v24 = vld [vmem:[%s0 + $0x78] sm:$0xff]
    %s25 = scalar_lea.vmem %s0, 128
    %v26 = vld [vmem:[%s25] sm:$0xff]
    %v27 = vld [vmem:[%s25 + $0x8] sm:$0xff]
    %v28 = vld [vmem:[%s25 + $0x10] sm:$0xff]
    %v29 = vld [vmem:[%s25 + $0x18] sm:$0xff]
    %v30 = vld [vmem:[%s25 + $0x20] sm:$0xff]
    %v31 = vld [vmem:[%s25 + $0x28] sm:$0xff]
    %v32 = vld [vmem:[%s25 + $0x30] sm:$0xff]
    %v33 = vld [vmem:[%s25 + $0x38] sm:$0xff]
    %v34 = vld [vmem:[%s25 + $0x40] sm:$0xff]
    %v35 = vld [vmem:[%s25 + $0x48] sm:$0xff]
    %v36 = vld [vmem:[%s25 + $0x50] sm:$0xff]
    %v37 = vld [vmem:[%s25 + $0x58] sm:$0xff]
    %v38 = vld [vmem:[%s25 + $0x60] sm:$0xff]
    %v39 = vld [vmem:[%s25 + $0x68] sm:$0xff]
    %v40 = vld [vmem:[%s25 + $0x70] sm:$0xff]
    %v41 = vld [vmem:[%s25 + $0x78] sm:$0xff]
    %v42 = vmax.f32 %v9, %v26
    %v43 = vmax.f32 %v10, %v27
    %v44 = vmax.f32 %v11, %v28
    %v45 = vmax.f32 %v12, %v29
    %v46 = vmax.f32 %v13, %v30
    %v47 = vmax.f32 %v14, %v31
    %v48 = vmax.f32 %v15, %v32
    %v49 = vmax.f32 %v16, %v33
    %v50 = vmax.f32 %v17, %v34
    %v51 = vmax.f32 %v18, %v35
    %v52 = vmax.f32 %v19, %v36
    %v53 = vmax.f32 %v20, %v37
    %v54 = vmax.f32 %v21, %v38
    %v55 = vmax.f32 %v22, %v39
    %v56 = vmax.f32 %v23, %v40
    %v57 = vmax.f32 %v24, %v41
    %v58 = vmax.f32 %v42, %v43
    %v59 = vmax.f32 %v43, %v44
    %v60 = vmax.f32 %v44, %v45
    %v61 = vmax.f32 %v45, %v46
    %v62 = vmax.f32 %v46, %v47
    %v63 = vmax.f32 %v47, %v48
    %v64 = vmax.f32 %v48, %v49
    %v65 = vmax.f32 %v49, %v50
    %v66 = vmax.f32 %v50, %v51
    %v67 = vmax.f32 %v51, %v52
    %v68 = vmax.f32 %v52, %v53
    %v69 = vmax.f32 %v53, %v54
    %v70 = vmax.f32 %v54, %v55
    %v71 = vmax.f32 %v55, %v56
    %v72 = vmax.f32 %v56, %v57
    %v73 = vmul.f32 %v58, 0.5
    %v74 = vmul.f32 %v59, 0.5
    %v75 = vmul.f32 %v60, 0.5
    %v76 = vmul.f32 %v61, 0.5
    %v77 = vmul.f32 %v62, 0.5
    %v78 = vmul.f32 %v63, 0.5
    %v79 = vmul.f32 %v64, 0.5
    %v80 = vmul.f32 %v65, 0.5
    %v81 = vmul.f32 %v66, 0.5
    %v82 = vmul.f32 %v67, 0.5
    %v83 = vmul.f32 %v68, 0.5
    %v84 = vmul.f32 %v69, 0.5
    %v85 = vmul.f32 %v70, 0.5
    %v86 = vmul.f32 %v71, 0.5
    %v87 = vmul.f32 %v72, 0.5
    %v88 = vld [vmem:[%s25] sm:$0x7f]
    %v89 = vld [vmem:[%s25 + $0x8] sm:$0x7f]
    %v90 = vld [vmem:[%s25 + $0x10] sm:$0x7f]
    %v91 = vld [vmem:[%s25 + $0x18] sm:$0x7f]
    %v92 = vld [vmem:[%s25 + $0x20] sm:$0x7f]
    %v93 = vld [vmem:[%s25 + $0x28] sm:$0x7f]
    %v94 = vld [vmem:[%s25 + $0x30] sm:$0x7f]
    %v95 = vld [vmem:[%s25 + $0x38] sm:$0x7f]
    %v96 = vld [vmem:[%s25 + $0x40] sm:$0x7f]
    %v97 = vld [vmem:[%s25 + $0x48] sm:$0x7f]
    %v98 = vld [vmem:[%s25 + $0x50] sm:$0x7f]
    %v99 = vld [vmem:[%s25 + $0x58] sm:$0x7f]
    %v100 = vld [vmem:[%s25 + $0x60] sm:$0x7f]
    %v101 = vld [vmem:[%s25 + $0x68] sm:$0x7f]
    %v102 = vld [vmem:[%s25 + $0x70] sm:$0x7f]
    %v103 = vld [vmem:[%s25 + $0x78] sm:$0x7f]
    %v104 = vld [vmem:[%s0 + $0x1] sm:$0x7f]
    %v105 = vld [vmem:[%s0 + $0x9] sm:$0x7f]
    %v106 = vld [vmem:[%s0 + $0x11] sm:$0x7f]
    %v107 = vld [vmem:[%s0 + $0x19] sm:$0x7f]
    %v108 = vld [vmem:[%s0 + $0x21] sm:$0x7f]
    %v109 = vld [vmem:[%s0 + $0x29] sm:$0x7f]
    %v110 = vld [vmem:[%s0 + $0x31] sm:$0x7f]
    %v111 = vld [vmem:[%s0 + $0x39] sm:$0x7f]
    %v112 = vld [vmem:[%s0 + $0x41] sm:$0x7f]
    %v113 = vld [vmem:[%s0 + $0x49] sm:$0x7f]
    %v114 = vld [vmem:[%s0 + $0x51] sm:$0x7f]
    %v115 = vld [vmem:[%s0 + $0x59] sm:$0x7f]
    %v116 = vld [vmem:[%s0 + $0x61] sm:$0x7f]
    %v117 = vld [vmem:[%s0 + $0x69] sm:$0x7f]
    %v118 = vld [vmem:[%s0 + $0x71] sm:$0x7f]
    %v119 = vld [vmem:[%s0 + $0x79] sm:$0x7f]
    %v120 = vmax.f32 %v88, %v104
    %v121 = vmax.f32 %v89, %v105
    %v122 = vmax.f32 %v90, %v106
    %v123 = vmax.f32 %v91, %v107
    %v124 = vmax.f32 %v92, %v108
    %v125 = vmax.f32 %v93, %v109
    %v126 = vmax.f32 %v94, %v110
    %v127 = vmax.f32 %v95, %v111
    %v128 = vmax.f32 %v96, %v112
    %v129 = vmax.f32 %v97, %v113
    %v130 = vmax.f32 %v98, %v114
    %v131 = vmax.f32 %v99, %v115
    %v132 = vmax.f32 %v100, %v116
    %v133 = vmax.f32 %v101, %v117
    %v134 = vmax.f32 %v102, %v118
    %v135 = vmax.f32 %v103, %v119
    %v136 = vmax.f32 %v120, %v121
    %v137 = vmax.f32 %v121, %v122
    %v138 = vmax.f32 %v122, %v123
    %v139 = vmax.f32 %v123, %v124
    %v140 = vmax.f32 %v124, %v125
    %v141 = vmax.f32 %v125, %v126
    %v142 = vmax.f32 %v126, %v127
    %v143 = vmax.f32 %v127, %v128
    %v144 = vmax.f32 %v128, %v129
    %v145 = vmax.f32 %v129, %v130
    %v146 = vmax.f32 %v130, %v131
    %v147 = vmax.f32 %v131, %v132
    %v148 = vmax.f32 %v132, %v133
    %v149 = vmax.f32 %v133, %v134
    %v150 = vmax.f32 %v134, %v135
    %v166 = vrot.slane %v136, 7
    %v167 = vrot.slane %v137, 7
    %v168 = vrot.slane %v138, 7
    %v169 = vrot.slane %v139, 7
    %v170 = vrot.slane %v140, 7
    %v171 = vrot.slane %v141, 7
    %v172 = vrot.slane %v142, 7
    %v173 = vrot.slane %v143, 7
    %v174 = vrot.slane %v144, 7
    %v175 = vrot.slane %v145, 7
    %v176 = vrot.slane %v146, 7
    %v177 = vrot.slane %v147, 7
    %v178 = vrot.slane %v148, 7
    %v179 = vrot.slane %v149, 7
    %v180 = vrot.slane %v150, 7
    %vm196 = vcmask 1040384
    %v197 = vsel %vm196, 0.0, %v166
    %v198 = vsel %vm196, 0.0, %v167
    %v199 = vsel %vm196, 0.0, %v168
    %v200 = vsel %vm196, 0.0, %v169
    %v201 = vsel %vm196, 0.0, %v170
    %v202 = vsel %vm196, 0.0, %v171
    %v203 = vsel %vm196, 0.0, %v172
    %v204 = vsel %vm196, 0.0, %v173
    %v205 = vsel %vm196, 0.0, %v174
    %v206 = vsel %vm196, 0.0, %v175
    %v207 = vsel %vm196, 0.0, %v176
    %v208 = vsel %vm196, 0.0, %v177
    %v209 = vsel %vm196, 0.0, %v178
    %v210 = vsel %vm196, 0.0, %v179
    %v211 = vsel %vm196, 0.0, %v180
    %v212 = vmul.f32 %v197, 0.25
    %v213 = vmul.f32 %v198, 0.25
    %v214 = vmul.f32 %v199, 0.25
    %v215 = vmul.f32 %v200, 0.25
    %v216 = vmul.f32 %v201, 0.25
    %v217 = vmul.f32 %v202, 0.25
    %v218 = vmul.f32 %v203, 0.25
    %v219 = vmul.f32 %v204, 0.25
    %v220 = vmul.f32 %v205, 0.25
    %v221 = vmul.f32 %v206, 0.25
    %v222 = vmul.f32 %v207, 0.25
    %v223 = vmul.f32 %v208, 0.25
    %v224 = vmul.f32 %v209, 0.25
    %v225 = vmul.f32 %v210, 0.25
    %v226 = vmul.f32 %v211, 0.25
    %v227 = vadd.f32 %v73, %v212
    %v228 = vadd.f32 %v74, %v213
    %v229 = vadd.f32 %v75, %v214
    %v230 = vadd.f32 %v76, %v215
    %v231 = vadd.f32 %v77, %v216
    %v232 = vadd.f32 %v78, %v217
    %v233 = vadd.f32 %v79, %v218
    %v234 = vadd.f32 %v80, %v219
    %v235 = vadd.f32 %v81, %v220
    %v236 = vadd.f32 %v82, %v221
    %v237 = vadd.f32 %v83, %v222
    %v238 = vadd.f32 %v84, %v223
    %v239 = vadd.f32 %v85, %v224
    %v240 = vadd.f32 %v86, %v225
    %v241 = vadd.f32 %v87, %v226
    %vm258 = vcmask 1046528
    %v259 = vrot.slane %v212, 1
    %v260 = vrot.slane 0.0, 1
    %v261 = vsel %vm258, %v259, %v260
    %v262 = vrot.slane %v213, 1
    %v263 = vsel %vm258, %v262, %v260
    %v264 = vrot.slane %v214, 1
    %v265 = vsel %vm258, %v264, %v260
    %v266 = vrot.slane %v215, 1
    %v267 = vsel %vm258, %v266, %v260
    %v268 = vrot.slane %v216, 1
    %v269 = vsel %vm258, %v268, %v260
    %v270 = vrot.slane %v217, 1
    %v271 = vsel %vm258, %v270, %v260
    %v272 = vrot.slane %v218, 1
    %v273 = vsel %vm258, %v272, %v260
    %v274 = vrot.slane %v219, 1
    %v275 = vsel %vm258, %v274, %v260
    %v276 = vrot.slane %v220, 1
    %v277 = vsel %vm258, %v276, %v260
    %v278 = vrot.slane %v221, 1
    %v279 = vsel %vm258, %v278, %v260
    %v280 = vrot.slane %v222, 1
    %v281 = vsel %vm258, %v280, %v260
    %v282 = vrot.slane %v223, 1
    %v283 = vsel %vm258, %v282, %v260
    %v284 = vrot.slane %v224, 1
    %v285 = vsel %vm258, %v284, %v260
    %v286 = vrot.slane %v225, 1
    %v287 = vsel %vm258, %v286, %v260
    %v288 = vrot.slane %v226, 1
    %v289 = vsel %vm258, %v288, %v260
    %v305 = vadd.f32 %v227, %v261
    %v306 = vadd.f32 %v228, %v263
    %v307 = vadd.f32 %v229, %v265
    %v308 = vadd.f32 %v230, %v267
    %v309 = vadd.f32 %v231, %v269
    %v310 = vadd.f32 %v232, %v271
    %v311 = vadd.f32 %v233, %v273
    %v312 = vadd.f32 %v234, %v275
    %v313 = vadd.f32 %v235, %v277
    %v314 = vadd.f32 %v236, %v279
    %v315 = vadd.f32 %v237, %v281
    %v316 = vadd.f32 %v238, %v283
    %v317 = vadd.f32 %v239, %v285
    %v318 = vadd.f32 %v240, %v287
    %v319 = vadd.f32 %v241, %v289
    %v320 = vmul.f32 %v306, 0.25
    %v321 = vmul.f32 %v308, 0.25
    %v322 = vmul.f32 %v310, 0.25
    %v323 = vmul.f32 %v312, 0.25
    %v324 = vmul.f32 %v314, 0.25
    %v325 = vmul.f32 %v316, 0.25
    %v326 = vmul.f32 %v318, 0.25
    %v327 = vmul.f32 %v305, 0.5
    %v328 = vmul.f32 %v307, 0.5
    %v329 = vmul.f32 %v309, 0.5
    %v330 = vmul.f32 %v311, 0.5
    %v331 = vmul.f32 %v313, 0.5
    %v332 = vmul.f32 %v315, 0.5
    %v333 = vmul.f32 %v317, 0.5
    %v334 = vmul.f32 %v319, 0.5
    %v335 = vadd.f32 %v327, 0.0
    %v336 = vadd.f32 %v320, %v328
    %v337 = vadd.f32 %v321, %v329
    %v338 = vadd.f32 %v322, %v330
    %v339 = vadd.f32 %v323, %v331
    %v340 = vadd.f32 %v324, %v332
    %v341 = vadd.f32 %v325, %v333
    %v342 = vadd.f32 %v326, %v334
    %v343 = vadd.f32 %v335, %v320
    %v344 = vadd.f32 %v336, %v321
    %v345 = vadd.f32 %v337, %v322
    %v346 = vadd.f32 %v338, %v323
    %v347 = vadd.f32 %v339, %v324
    %v348 = vadd.f32 %v340, %v325
    %v349 = vadd.f32 %v341, %v326
    %v350 = vadd.f32 %v342, 0.0
    %vm351 = vcmask 64512
    %352 = vst.msk [vmem:[#allocation2] sm:$0xff] %vm351, %v343
    %353 = vst.msk [vmem:[#allocation2 + $0x8] sm:$0xff] %vm351, %v344
    %354 = vst.msk [vmem:[#allocation2 + $0x10] sm:$0xff] %vm351, %v345
    %355 = vst.msk [vmem:[#allocation2 + $0x18] sm:$0xff] %vm351, %v346
    %356 = vst.msk [vmem:[#allocation2 + $0x20] sm:$0xff] %vm351, %v347
    %357 = vst.msk [vmem:[#allocation2 + $0x28] sm:$0xff] %vm351, %v348
    %358 = vst.msk [vmem:[#allocation2 + $0x30] sm:$0xff] %vm351, %v349
    %359 = vst.msk [vmem:[#allocation2 + $0x38] sm:$0xff] %vm351, %v350
    // Predicated region
    $region6: #{tpu_custom_call.1} parent=1 // pred_check
      _
    $region7: #{tpu_custom_call.1} parent=1 // pred_check_branch
      %361 = sbr.rel (0) target = $region9
    $region8: #{tpu_custom_call.1} parent=1 // pred_region
      %s363 = ssub.s32 1024, 1024
      %364 = vsyncadd [#allocation3], %s363
      %s365 = sshll.u32 [#allocation2], 4
      %s366 = int_to_ptr.vmem [resolvable:$true] %s365
      %371 = dma.vmem_to_hbm [thread:$0]  %s366, 1024, %s1, [#allocation3], 128, 128, 8
    $region9: #{tpu_custom_call.1} parent=1 // pred_fallthru
      _
    // Predicated region
    $region10: #{tpu_custom_call.1} parent=1 // pred_check
      _
    $region11: #{tpu_custom_call.1} parent=1 // pred_check_branch
      %373 = sbr.rel (0) target = $region13
    $region12: #{tpu_custom_call.1} parent=1 // pred_region
      %374 = dma.done [#allocation3], 1024
    $region13: #{tpu_custom_call.1} parent=1 // pred_fallthru
      _
    %375 = vsyncpa [#allocation3], 1

</llo_original>
